<compile_context>
chip_gen: v6e
topology: v6e:2x2x1
jax: 0.10.0
libtpu: 0.0.40
codegen_flags: <defaults>
</compile_context>

<pallas_src>
import math
import jax
import jax.numpy as jnp
from jax.experimental import pallas as pl
from jax.experimental.pallas import tpu as pltpu


def _round_up(x, m):
    return ((x + m - 1) // m) * m


def _vmem_capacity_bytes():
    """Best-effort physical VMEM query; conservative 64 MiB fallback."""
    try:
        info = pltpu.get_tpu_info()
        for attr in ("vmem_capacity_bytes", "vmem_size_bytes", "vmem_bytes"):
            v = getattr(info, attr, None)
            if v:
                return int(v)
    except Exception:
        pass
    return 64 * 1024 * 1024


# ----------------------------------------------------------------------------
# ROIAlign pooler (plain JAX glue, faithful to maskrcnn_benchmark semantics)
# ----------------------------------------------------------------------------
def fpn_pooler(features, rois, scales, output_size, sampling_ratio):
    """features: list of (N, C, Hl, Wl) NCHW arrays; rois: (K, 5) [b, x1,y1,x2,y2].

    Returns (K, C, Ph, Pw) in bf16 (MXU-ready, no later cast pass needed).
    """
    K = rois.shape[0]
    batch_idx = rois[:, 0].astype(jnp.int32)
    boxes = rois[:, 1:5]
    L = len(features)
    Nb, C = int(features[0].shape[0]), int(features[0].shape[1])
    pooled_h, pooled_w = output_size
    gh = gw = sampling_ratio
    # TODO(synk): adaptive sampling_ratio <= 0 (ceil(roi_h/pooled_h)) not implemented.

    if L == 1:
        level_idx = jnp.zeros((K,), jnp.int32)
    else:
        # LevelMapper(k_min, k_max, canonical_scale=224, canonical_level=4)
        k_min = -math.log2(scales[0])
        k_max = -math.log2(scales[-1])
        bw = boxes[:, 2] - boxes[:, 0] + 1.0
        bh = boxes[:, 3] - boxes[:, 1] + 1.0
        s = jnp.sqrt(bw * bh)
        target = jnp.floor(4.0 + jnp.log2(s / 224.0 + 1e-6))
        target = jnp.clip(target, k_min, k_max)
        level_idx = (target - k_min).astype(jnp.int32)

    # Pad levels to a common spatial size so a single flat gather can address
    # any (level, image) pair. Only 4 corner values per sample point are
    # gathered -- never a full per-ROI feature-map copy.
    h_max = max(int(f.shape[2]) for f in features)
    w_max = max(int(f.shape[3]) for f in features)
    padded = jnp.stack([
        jnp.pad(f, ((0, 0), (0, 0),
                    (0, h_max - f.shape[2]), (0, w_max - f.shape[3])))
        for f in features
    ])                                                  # (L, Nb, C, Hmax, Wmax)
    flat = padded.reshape(L * Nb, C, h_max * w_max)     # (L*Nb, C, HW)

    level_h = jnp.array([f.shape[2] for f in features], jnp.int32)
    level_w = jnp.array([f.shape[3] for f in features], jnp.int32)
    scales_arr = jnp.array(scales, jnp.float32)

    scale = scales_arr[level_idx]                       # (K,)
    hl = level_h[level_idx]
    wl = level_w[level_idx]
    hf = hl.astype(jnp.float32)
    wf = wl.astype(jnp.float32)

    roi_start_w = boxes[:, 0] * scale
    roi_start_h = boxes[:, 1] * scale
    roi_w = jnp.maximum(boxes[:, 2] * scale - roi_start_w, 1.0)
    roi_h = jnp.maximum(boxes[:, 3] * scale - roi_start_h, 1.0)
    bin_h = roi_h / pooled_h
    bin_w = roi_w / pooled_w

    ph = jnp.arange(pooled_h, dtype=jnp.float32)
    pw = jnp.arange(pooled_w, dtype=jnp.float32)
    iy = jnp.arange(gh, dtype=jnp.float32)
    ix = jnp.arange(gw, dtype=jnp.float32)

    # (K, Ny) / (K, Nx) sample-point coordinates, Ny = Ph*gh, Nx = Pw*gw
    ys = (roi_start_h[:, None, None]
          + ph[None, :, None] * bin_h[:, None, None]
          + (iy[None, None, :] + 0.5) * bin_h[:, None, None] / gh).reshape(K, -1)
    xs = (roi_start_w[:, None, None]
          + pw[None, :, None] * bin_w[:, None, None]
          + (ix[None, None, :] + 0.5) * bin_w[:, None, None] / gw).reshape(K, -1)
    Ny = pooled_h * gh
    Nx = pooled_w * gw
    S = Ny * Nx

    y = ys[:, :, None]                                  # (K, Ny, 1)
    x = xs[:, None, :]                                  # (K, 1, Nx)
    hfk = hf[:, None, None]
    wfk = wf[:, None, None]
    hlk = hl[:, None, None]
    wlk = wl[:, None, None]
    oob = (y < -1.0) | (y > hfk) | (x < -1.0) | (x > wfk)   # (K, Ny, Nx)

    y = jnp.maximum(y, 0.0)
    x = jnp.maximum(x, 0.0)
    y_low = jnp.minimum(jnp.floor(y).astype(jnp.int32), hlk - 1)
    x_low = jnp.minimum(jnp.floor(x).astype(jnp.int32), wlk - 1)
    y_high = jnp.minimum(y_low + 1, hlk - 1)
    x_high = jnp.minimum(x_low + 1, wlk - 1)
    y = jnp.where(y_low >= hlk - 1, hfk - 1.0, y)
    x = jnp.where(x_low >= wlk - 1, wfk - 1.0, x)
    ly = y - y_low.astype(jnp.float32)
    lx = x - x_low.astype(jnp.float32)
    hy = 1.0 - ly
    hx = 1.0 - lx

    img = level_idx * Nb + batch_idx                    # (K,)

    def corner(yy, xx):
        # yy: (K, Ny, 1), xx: (K, 1, Nx) int32 -> gathered values (K, S, C)
        idx = (yy * w_max + xx).reshape(K, S)
        return flat[img[:, None], :, idx]               # advanced idx -> (K, S, C)

    w1 = (hy * hx).reshape(K, S, 1)
    w2 = (hy * lx).reshape(K, S, 1)
    w3 = (ly * hx).reshape(K, S, 1)
    w4 = (ly * lx).reshape(K, S, 1)

    val = (w1 * corner(y_low, x_low) + w2 * corner(y_low, x_high)
           + w3 * corner(y_high, x_low) + w4 * corner(y_high, x_high))
    val = jnp.where(oob.reshape(K, S, 1), 0.0, val)     # (K, S, C)

    val = val.reshape(K, pooled_h, gh, pooled_w, gw, C).mean(axis=(2, 4))
    pooled = jnp.transpose(val, (0, 3, 1, 2))           # (K, C, Ph, Pw)
    return pooled.astype(jnp.bfloat16)                  # bf16 for the MXU kernel


# ----------------------------------------------------------------------------
# Pallas kernels: fused fc6 -> ReLU -> fc7 -> ReLU
# ----------------------------------------------------------------------------
def _mlp_kernel_single(x_ref, w6_ref, b6_ref, w7_ref, b7_ref, out_ref):
    # Whole contraction in one step (128-MiB-VMEM chips): no accumulator,
    # w6's block index is constant so it is DMA'd from HBM exactly once.
    h = jnp.dot(x_ref[...], w6_ref[...], preferred_element_type=jnp.float32)
    h = jnp.maximum(h + b6_ref[...], 0.0)                       # fc6 + ReLU
    h2 = jnp.dot(h.astype(w7_ref.dtype), w7_ref[...],
                 preferred_element_type=jnp.float32)            # fc7
    out_ref[...] = jnp.maximum(h2 + b7_ref[...], 0.0)           # ReLU


def _mlp_kernel_ktiled(x_ref, w6_ref, b6_ref, w7_ref, b7_ref, out_ref):
    # K-tiled contraction (64-MiB-VMEM chips). fc6 partials accumulate directly
    # into the f32 out_ref (its block index is constant across k) -- no scratch.
    k = pl.program_id(1)

    @pl.when(k == 0)
    def _init():
        out_ref[...] = jnp.zeros_like(out_ref)

    out_ref[...] += jnp.dot(x_ref[...], w6_ref[...],
                            preferred_element_type=jnp.float32)

    @pl.when(k == pl.num_programs(1) - 1)
    def _finalize():
        h = jnp.maximum(out_ref[...] + b6_ref[...], 0.0)        # fc6 + ReLU
        h2 = jnp.dot(h.astype(w7_ref.dtype), w7_ref[...],
                     preferred_element_type=jnp.float32)        # fc7
        out_ref[...] = jnp.maximum(h2 + b7_ref[...], 0.0)       # ReLU


def _vmem_footprint(tm, tk, hp):
    """Conservative resident-VMEM estimate (every operand double-buffered)."""
    dbl = 2
    return (tm * tk * 2 * dbl        # x tile (bf16)
            + tk * hp * 2 * dbl      # w6 panel (bf16)
            + hp * hp * 2 * dbl      # w7 (bf16, grid-invariant)
            + 2 * hp * 4 * dbl       # b6, b7 (f32)
            + tm * hp * 4 * dbl)     # out / fc6 accumulator (f32)


def two_layer_mlp(x, w6, b6, w7, b7, *, block_rows=512):
    """relu(relu(x @ w6 + b6) @ w7 + b7) fused in one Pallas kernel.

    x: (N, D); w6: (D, H); b6: (1, H); w7: (H, H); b7: (1, H) -> (N, H) f32.
    """
    N, D = x.shape
    H = w6.shape[1]

    # Lane-pad the hidden dim so both matmul outputs / stores are lane-dense.
    Hp = max(128, _round_up(H, 128))
    if Hp != H:
        w6 = jnp.pad(w6, ((0, 0), (0, Hp - H)))
        b6 = jnp.pad(b6, ((0, 0), (0, Hp - H)))
        w7 = jnp.pad(w7, ((0, Hp - H), (0, Hp - H)))
        b7 = jnp.pad(b7, ((0, 0), (0, Hp - H)))

    # Zero-pad the contraction dim to a multiple of 128 ONCE in the wrapper so
    # every K tile divides it exactly -> no in-kernel tail mask, ever.
    Dp = _round_up(D, 128)
    if Dp != D:
        x = jnp.pad(x, ((0, 0), (0, Dp - D)))
        w6 = jnp.pad(w6, ((0, Dp - D), (0, 0)))

    # Zero-pad rows to a multiple of 16 (bf16 sublane packing); padded rows are
    # computed and discarded (each output row depends only on its own x row).
    Np = _round_up(max(N, 16), 16)
    if Np != N:
        x = jnp.pad(x, ((0, Np - N), (0, 0)))

    # bf16 matmul operands (no-op if the caller already supplies bf16).
    if x.dtype != jnp.bfloat16:
        x = x.astype(jnp.bfloat16)
    if w6.dtype != jnp.bfloat16:
        w6 = w6.astype(jnp.bfloat16)
    if w7.dtype != jnp.bfloat16:
        w7 = w7.astype(jnp.bfloat16)
    b6 = b6.astype(jnp.float32)
    b7 = b7.astype(jnp.float32)

    # Row tile: big (amortizes w6 restreaming + finalize), multiple of 16, and
    # >= 2 row blocks when there is enough work so v7x's two TensorCores can
    # both take a share of the "parallel" row axis.
    tm = min(block_rows, Np)
    if Np > 256 and pl.cdiv(Np, tm) < 2:
        tm = _round_up(pl.cdiv(Np, 2), 16)
    nm = pl.cdiv(Np, tm)

    # K tile: the largest tk (multiple of 128, dividing Dp) whose conservative
    # double-buffered footprint fits the per-generation VMEM budget.
    vmem_cap = _vmem_capacity_bytes()
    budget = max(vmem_cap - 40 * 1024 * 1024, 16 * 1024 * 1024)
    n128 = Dp // 128
    tk, nk = 128, n128
    for cand in sorted(d for d in range(1, n128 + 1) if n128 % d == 0):
        tk_cand = Dp // cand
        if _vmem_footprint(tm, tk_cand, Hp) <= budget:
            tk, nk = tk_cand, cand
            break
    footprint = _vmem_footprint(tm, tk, Hp)
    vmem_limit = min(int(vmem_cap * 0.85), footprint + 24 * 1024 * 1024)
    vmem_limit = max(vmem_limit, 32 * 1024 * 1024)

    if nk == 1:
        kernel = _mlp_kernel_single
        grid = (nm,)
        in_specs = [
            pl.BlockSpec((tm, Dp), lambda i: (i, 0)),    # x row tile
            pl.BlockSpec((Dp, Hp), lambda i: (0, 0)),    # w6 (fetched once)
            pl.BlockSpec((1, Hp), lambda i: (0, 0)),     # b6
            pl.BlockSpec((Hp, Hp), lambda i: (0, 0)),    # w7
            pl.BlockSpec((1, Hp), lambda i: (0, 0)),     # b7
        ]
        out_spec = pl.BlockSpec((tm, Hp), lambda i: (i, 0))
        dim_sem = ("parallel",)
    else:
        kernel = _mlp_kernel_ktiled
        grid = (nm, nk)                                  # reduction axis last
        in_specs = [
            pl.BlockSpec((tm, tk), lambda i, k: (i, k)),  # x row/K tile
            pl.BlockSpec((tk, Hp), lambda i, k: (k, 0)),  # w6 K panel
            pl.BlockSpec((1, Hp), lambda i, k: (0, 0)),   # b6 (invariant)
            pl.BlockSpec((Hp, Hp), lambda i, k: (0, 0)),  # w7 (invariant)
            pl.BlockSpec((1, Hp), lambda i, k: (0, 0)),   # b7 (invariant)
        ]
        out_spec = pl.BlockSpec((tm, Hp), lambda i, k: (i, 0))
        dim_sem = ("parallel", "arbitrary")

    # Honest cost estimate: w6 is streamed once if it is grid-invariant,
    # otherwise once per row block.
    w6_reads = 1 if nk == 1 else nm
    flops = 2 * Np * Dp * Hp + 2 * Np * Hp * Hp
    bytes_accessed = (Np * Dp * 2 + Dp * Hp * 2 * w6_reads + Hp * Hp * 2
                      + 2 * Hp * 4 + Np * Hp * 4)

    out = pl.pallas_call(
        kernel,
        out_shape=jax.ShapeDtypeStruct((Np, Hp), jnp.float32),
        grid_spec=pltpu.PrefetchScalarGridSpec(
            num_scalar_prefetch=0,
            grid=grid,
            in_specs=in_specs,
            out_specs=out_spec,
        ),
        compiler_params=pltpu.CompilerParams(
            dimension_semantics=dim_sem,
            vmem_limit_bytes=vmem_limit,
        ),
        cost_estimate=pl.CostEstimate(
            flops=flops, transcendentals=0, bytes_accessed=bytes_accessed),
    )(x, w6, b6, w7, b7)

    if Np != N or Hp != H:
        out = out[:N, :H]
    return out


# ----------------------------------------------------------------------------
# Module wrapper
# ----------------------------------------------------------------------------
class FPN2MLPFeatureExtractorCustomizedPallas:
    def __init__(self, key, in_channels, resolution, scales, sampling_ratio,
                 representation_size):
        self.resolution = resolution
        self.scales = scales
        self.sampling_ratio = sampling_ratio
        input_size = in_channels * resolution ** 2
        k6, k7 = jax.random.split(key)
        # make_fc: Linear weights (deterministic synthetic init), bias = 0.
        # Weights stored as bf16 so the kernel gets MXU-native operands with
        # no per-call cast pass.
        self.w6 = (jax.random.normal(k6, (input_size, representation_size),
                                     jnp.float32) * 0.05).astype(jnp.bfloat16)
        self.b6 = jnp.zeros((1, representation_size), jnp.float32)
        self.w7 = (jax.random.normal(k7, (representation_size, representation_size),
                                     jnp.float32) * 0.05).astype(jnp.bfloat16)
        self.b7 = jnp.zeros((1, representation_size), jnp.float32)
        self.out_channels = representation_size

    def __call__(self, features, rois):
        pooled = fpn_pooler(features, rois, self.scales,
                            (self.resolution, self.resolution),
                            self.sampling_ratio)          # (K, C, res, res) bf16
        flat = pooled.reshape(pooled.shape[0], -1)         # x.view(x.size(0), -1)
        return two_layer_mlp(flat, self.w6, self.b6, self.w7, self.b7)


# ----------------------------------------------------------------------------
if __name__ == "__main__":
    key = jax.random.PRNGKey(0)
    k_feat0, k_feat1, k_params = jax.random.split(key, 3)

    # small config: in_channels=4, resolution=4, 2 FPN levels, sampling_ratio=2,
    # MLP_HEAD_DIM=32, image size 64x64, batch=2, 4 proposals per image.
    in_channels = 4
    resolution = 4
    scales = (0.25, 0.125)
    sampling_ratio = 2
    mlp_head_dim = 32

    feats = [
        jax.random.normal(k_feat0, (2, in_channels, 16, 16), jnp.float32),
        jax.random.normal(k_feat1, (2, in_channels, 8, 8), jnp.float32),
    ]

    # proposals as rois (K, 5) = [batch_idx, x1, y1, x2, y2] in image coords
    rois = jnp.array(
        [
            [0,  4.0,  4.0, 28.0, 28.0],
            [0, 10.0,  8.0, 50.0, 40.0],
            [0,  0.0,  0.0, 63.0, 63.0],
            [0, 20.0, 20.0, 36.0, 44.0],
            [1,  2.0,  6.0, 30.0, 58.0],
            [1, 16.0,  0.0, 60.0, 24.0],
            [1,  8.0,  8.0, 24.0, 24.0],
            [1,  0.0, 32.0, 48.0, 63.0],
        ],
        dtype=jnp.float32,
    )

    module = FPN2MLPFeatureExtractorCustomizedPallas(
        k_params, in_channels, resolution, scales, sampling_ratio, mlp_head_dim
    )

    out = module(feats, rois)
    out = jax.block_until_ready(out)
    assert out.shape == (rois.shape[0], mlp_head_dim)
    assert bool(jnp.all(jnp.isfinite(out)))
    print("KERNEL_OK")
</pallas_src>

<mosaic_0001>
module attributes {stable_mosaic.version = 11 : i64} {
  func.func @_mlp_kernel_single(%arg0: i32, %arg1: memref<16x128xbf16, #tpu.memory_space<vmem>>, %arg2: memref<128x128xbf16, #tpu.memory_space<vmem>>, %arg3: memref<1x128xf32, #tpu.memory_space<vmem>>, %arg4: memref<128x128xbf16, #tpu.memory_space<vmem>>, %arg5: memref<1x128xf32, #tpu.memory_space<vmem>>, %arg6: memref<16x128xf32, #tpu.memory_space<vmem>>) attributes {dimension_semantics = [#tpu.dimension_semantics<parallel>], iteration_bounds = array<i64: 1>, scalar_prefetch = 0 : i64, scratch_operands = 0 : i64, tpu.core_type = #tpu.core_type<tc>, window_params = [{transform_indices = @transform_0, window_bounds = array<i64: 16, 128>}, {pipeline_mode = #tpu.pipeline_mode<synchronous>, transform_indices = @transform_1, window_bounds = array<i64: 128, 128>}, {pipeline_mode = #tpu.pipeline_mode<synchronous>, transform_indices = @transform_2, window_bounds = array<i64: 1, 128>}, {pipeline_mode = #tpu.pipeline_mode<synchronous>, transform_indices = @transform_3, window_bounds = array<i64: 128, 128>}, {pipeline_mode = #tpu.pipeline_mode<synchronous>, transform_indices = @transform_4, window_bounds = array<i64: 1, 128>}, {transform_indices = @transform_5, window_bounds = array<i64: 16, 128>}]} {
    %c0 = arith.constant 0 : index
    %c0_0 = arith.constant 0 : index
    %0 = vector.load %arg1[%c0, %c0_0] : memref<16x128xbf16, #tpu.memory_space<vmem>>, vector<16x128xbf16>
    %c0_1 = arith.constant 0 : index
    %c0_2 = arith.constant 0 : index
    %1 = vector.load %arg2[%c0_1, %c0_2] : memref<128x128xbf16, #tpu.memory_space<vmem>>, vector<128x128xbf16>
    %cst = arith.constant dense<0.000000e+00> : vector<16x128xf32>
    %2 = tpu.matmul %0, %1, %cst {dimension_numbers = #tpu.dot_dimension_numbers<[1], [0], [0], [1], [0, 0, 1, 1], [], []>} : vector<16x128xbf16>, vector<128x128xbf16>, vector<16x128xf32> -> vector<16x128xf32>
    %c0_3 = arith.constant 0 : index
    %c0_4 = arith.constant 0 : index
    %3 = vector.load %arg3[%c0_3, %c0_4] : memref<1x128xf32, #tpu.memory_space<vmem>>, vector<1x128xf32>
    %4 = vector.broadcast %3 : vector<1x128xf32> to vector<16x128xf32>
    %5 = arith.addf %2, %4 : vector<16x128xf32>
    %cst_5 = arith.constant 0.000000e+00 : f32
    %6 = vector.broadcast %cst_5 : f32 to vector<16x128xf32>
    %7 = arith.maximumf %5, %6 : vector<16x128xf32>
    %8 = arith.truncf %7 : vector<16x128xf32> to vector<16x128xbf16>
    %c0_6 = arith.constant 0 : index
    %c0_7 = arith.constant 0 : index
    %9 = vector.load %arg4[%c0_6, %c0_7] : memref<128x128xbf16, #tpu.memory_space<vmem>>, vector<128x128xbf16>
    %cst_8 = arith.constant dense<0.000000e+00> : vector<16x128xf32>
    %10 = tpu.matmul %8, %9, %cst_8 {dimension_numbers = #tpu.dot_dimension_numbers<[1], [0], [0], [1], [0, 0, 1, 1], [], []>} : vector<16x128xbf16>, vector<128x128xbf16>, vector<16x128xf32> -> vector<16x128xf32>
    %c0_9 = arith.constant 0 : index
    %c0_10 = arith.constant 0 : index
    %11 = vector.load %arg5[%c0_9, %c0_10] : memref<1x128xf32, #tpu.memory_space<vmem>>, vector<1x128xf32>
    %12 = vector.broadcast %11 : vector<1x128xf32> to vector<16x128xf32>
    %13 = arith.addf %10, %12 : vector<16x128xf32>
    %cst_11 = arith.constant 0.000000e+00 : f32
    %14 = vector.broadcast %cst_11 : f32 to vector<16x128xf32>
    %15 = arith.maximumf %13, %14 : vector<16x128xf32>
    %c0_12 = arith.constant 0 : index
    %c0_13 = arith.constant 0 : index
    %16 = vector.load %arg6[%c0_12, %c0_13] : memref<16x128xf32, #tpu.memory_space<vmem>>, vector<16x128xf32>
    tpu.vector_store %arg6[%c0_12, %c0_13], %15 {strides = array<i32>} : memref<16x128xf32, #tpu.memory_space<vmem>>, vector<16x128xf32>,
    return
  }
  func.func @transform_0(%arg0: i32) -> (i32, i32) {
    %c0_i32 = arith.constant 0 : i32
    %c0_i32_0 = arith.constant 0 : i32
    return %arg0, %c0_i32 : i32, i32
  }
  func.func @transform_1(%arg0: i32) -> (i32, i32) {
    %c0_i32 = arith.constant 0 : i32
    %c0_i32_0 = arith.constant 0 : i32
    %c0_i32_1 = arith.constant 0 : i32
    return %c0_i32, %c0_i32_0 : i32, i32
  }
  func.func @transform_2(%arg0: i32) -> (i32, i32) {
    %c0_i32 = arith.constant 0 : i32
    %c0_i32_0 = arith.constant 0 : i32
    %c0_i32_1 = arith.constant 0 : i32
    return %c0_i32, %c0_i32_0 : i32, i32
  }
  func.func @transform_3(%arg0: i32) -> (i32, i32) {
    %c0_i32 = arith.constant 0 : i32
    %c0_i32_0 = arith.constant 0 : i32
    %c0_i32_1 = arith.constant 0 : i32
    return %c0_i32, %c0_i32_0 : i32, i32
  }
  func.func @transform_4(%arg0: i32) -> (i32, i32) {
    %c0_i32 = arith.constant 0 : i32
    %c0_i32_0 = arith.constant 0 : i32
    %c0_i32_1 = arith.constant 0 : i32
    return %c0_i32, %c0_i32_0 : i32, i32
  }
  func.func @transform_5(%arg0: i32) -> (i32, i32) {
    %c0_i32 = arith.constant 0 : i32
    %c0_i32_0 = arith.constant 0 : i32
    return %arg0, %c0_i32 : i32, i32
  }
}

</mosaic_0001>

<llo_original>
// kernel: tpu_custom_call.1
$region0: #{tpu_custom_call.1}
  #allocation0 [shape = 'u32[]', space=smem, size = 0x4, offset = 0x4, fixed_abs, tag = 'smem constant byte address 0x4 - core index']
  #allocation1 [shape = 'u32[144,128]{1,0:T(1,128)}', space=vmem, size = 0x12000, scoped, tag = 'internal scratch']
  %s0 = inlined_call_operand.hbm [shape: bf16[16,128], index: 0, kind: input, shape index: {}]
  %s1 = inlined_call_operand.hbm [shape: bf16[128,128], index: 1, kind: input, shape index: {}]
  %s2 = inlined_call_operand.vmem [shape: f32[1,128], index: 2, kind: input, shape index: {}]
  %s3 = inlined_call_operand.hbm [shape: bf16[128,128], index: 3, kind: input, shape index: {}]
  %s4 = inlined_call_operand.vmem [shape: f32[1,128], index: 4, kind: input, shape index: {}]
  %s5 = inlined_call_operand.hbm [shape: f32[16,128], index: 5, kind: output, shape index: {}]
  %s6 = sld [smem:[#allocation0]]
  $region42: #{tpu_custom_call.1} parent=0
    _
  %s8 = ssub.s32 1, %s6
  %s9 = scalar_select 0, %s8, %s6
  $region1: #{tpu_custom_call.1} parent=0
    #allocation2 [shape = 'u8[4096]{0}', space=vmem, size = 0x1000, scoped, tag = 'input window, operand 0, single buffered']
    #allocation3 [shape = 's32[1]{0}', space=sflag, size = 0x4, scoped, tag = 'scoped memory for tpu_custom_call.1']
    #allocation4 [shape = 's32[1]{0}', space=sflag, size = 0x4, scoped, tag = 'scoped memory for tpu_custom_call.1']
    #allocation5 [shape = 'u8[32768]{0}', space=vmem, size = 0x8000, scoped, tag = 'input window, operand 1, single buffered']
    #allocation6 [shape = 's32[1]{0}', space=sflag, size = 0x4, scoped, tag = 'scoped memory for tpu_custom_call.1']
    #allocation7 [shape = 'u8[32768]{0}', space=vmem, size = 0x8000, scoped, tag = 'input window, operand 3, single buffered']
    #allocation8 [shape = 'u8[8192]{0}', space=vmem, size = 0x2000, scoped, tag = 'output window, operand 0, single buffered']
    %10 = vsyncpa [#allocation3], 0
    %11 = vsyncpa [#allocation6], 0
    %12 = vsyncpa [#allocation4], 0
    // Predicated region
    $region2: #{tpu_custom_call.1} parent=1 // pred_check
      _
    $region3: #{tpu_custom_call.1} parent=1 // pred_check_branch
      %14 = sbr.rel (0) target = $region5
    $region4: #{tpu_custom_call.1} parent=1 // pred_region
      %s16 = ssub.s32 128, 128
      %17 = vsyncadd [#allocation3], %s16
      %s18 = sshll.u32 [#allocation2], 4
      %s19 = int_to_ptr.vmem [resolvable:$true] %s18
      %24 = dma.hbm_to_vmem [thread:$0]  %s0, 128, %s19, [#allocation3], 64, 64, 4
    $region5: #{tpu_custom_call.1} parent=1 // pred_fallthru
      _
    // Predicated region
    $region6: #{tpu_custom_call.1} parent=1 // pred_check
      _
    $region7: #{tpu_custom_call.1} parent=1 // pred_check_branch
      %26 = sbr.rel (0) target = $region9
    $region8: #{tpu_custom_call.1} parent=1 // pred_region
      %s28 = ssub.s32 1024, 1024
      %29 = vsyncadd [#allocation6], %s28
      %s30 = sshll.u32 [#allocation5], 4
      %s31 = int_to_ptr.vmem [resolvable:$true] %s30
      %36 = dma.hbm_to_vmem [thread:$0]  %s1, 1024, %s31, [#allocation6], 64, 64, 4
    $region9: #{tpu_custom_call.1} parent=1 // pred_fallthru
      _
    // Predicated region
    $region10: #{tpu_custom_call.1} parent=1 // pred_check
      _
    $region11: #{tpu_custom_call.1} parent=1 // pred_check_branch
      %38 = sbr.rel (0) target = $region13
    $region12: #{tpu_custom_call.1} parent=1 // pred_region
      _
    $region13: #{tpu_custom_call.1} parent=1 // pred_fallthru
      _
    // Predicated region
    $region14: #{tpu_custom_call.1} parent=1 // pred_check
      _
    $region15: #{tpu_custom_call.1} parent=1 // pred_check_branch
      %40 = sbr.rel (0) target = $region17
    $region16: #{tpu_custom_call.1} parent=1 // pred_region
      %s42 = ssub.s32 1024, 1024
      %43 = vsyncadd [#allocation6], %s42
      %s44 = sshll.u32 [#allocation7], 4
      %s45 = int_to_ptr.vmem [resolvable:$true] %s44
      %50 = dma.hbm_to_vmem [thread:$0]  %s3, 1024, %s45, [#allocation6], 64, 64, 4
    $region17: #{tpu_custom_call.1} parent=1 // pred_fallthru
      _
    // Predicated region
    $region18: #{tpu_custom_call.1} parent=1 // pred_check
      _
    $region19: #{tpu_custom_call.1} parent=1 // pred_check_branch
      %52 = sbr.rel (0) target = $region21
    $region20: #{tpu_custom_call.1} parent=1 // pred_region
      _
    $region21: #{tpu_custom_call.1} parent=1 // pred_fallthru
      _
    // Predicated region
    $region22: #{tpu_custom_call.1} parent=1 // pred_check
      _
    $region23: #{tpu_custom_call.1} parent=1 // pred_check_branch
      %54 = sbr.rel (0) target = $region25
    $region24: #{tpu_custom_call.1} parent=1 // pred_region
      %55 = dma.done [#allocation3], 128
    $region25: #{tpu_custom_call.1} parent=1 // pred_fallthru
      _
    // Predicated region
    $region26: #{tpu_custom_call.1} parent=1 // pred_check
      _
    $region27: #{tpu_custom_call.1} parent=1 // pred_check_branch
      %57 = sbr.rel (0) target = $region29
    $region28: #{tpu_custom_call.1} parent=1 // pred_region
      %58 = dma.done [#allocation6], 1024
    $region29: #{tpu_custom_call.1} parent=1 // pred_fallthru
      _
    // Predicated region
    $region30: #{tpu_custom_call.1} parent=1 // pred_check
      _
    $region31: #{tpu_custom_call.1} parent=1 // pred_check_branch
      %60 = sbr.rel (0) target = $region33
    $region32: #{tpu_custom_call.1} parent=1 // pred_region
      %61 = dma.done [#allocation6], 1024
    $region33: #{tpu_custom_call.1} parent=1 // pred_fallthru
      _
    %v63 = vld [vmem:[#allocation2] sm:$0xf]
    %v64 = vld [vmem:[#allocation2 + $0x4] sm:$0xf]
    %v65 = vld [vmem:[#allocation5] sm:$0xf]
    %v66 = vld [vmem:[#allocation5 + $0x4] sm:$0xf]
    %v67 = vld [vmem:[#allocation5 + $0x8] sm:$0xf]
    %v68 = vld [vmem:[#allocation5 + $0xc] sm:$0xf]
    %v69 = vld [vmem:[#allocation5 + $0x10] sm:$0xf]
    %v70 = vld [vmem:[#allocation5 + $0x14] sm:$0xf]
    %v71 = vld [vmem:[#allocation5 + $0x18] sm:$0xf]
    %v72 = vld [vmem:[#allocation5 + $0x1c] sm:$0xf]
    %v73 = vld [vmem:[#allocation5 + $0x20] sm:$0xf]
    %v74 = vld [vmem:[#allocation5 + $0x24] sm:$0xf]
    %v75 = vld [vmem:[#allocation5 + $0x28] sm:$0xf]
    %v76 = vld [vmem:[#allocation5 + $0x2c] sm:$0xf]
    %v77 = vld [vmem:[#allocation5 + $0x30] sm:$0xf]
    %v78 = vld [vmem:[#allocation5 + $0x34] sm:$0xf]
    %v79 = vld [vmem:[#allocation5 + $0x38] sm:$0xf]
    %v80 = vld [vmem:[#allocation5 + $0x3c] sm:$0xf]
    %v81 = vld [vmem:[%s2] sm:$0x1]
    %v83 = vlaneseq
    %v84 = vshrl.u32 %v83, 7
    %v85 = vsub.s32 0, %v84
    %v86 = vrot.slane %v81, %v85
    %v90 = vunpack.c.l.b16 %v63
    %v91 = vunpack.c.l.b16 %v64
    %v92 = vpack.c.b16 %v91, %v90
    %v110 = vunpack.c.l.b16 %v65
    %v111 = vunpack.c.l.b16 %v66
    %v112 = vunpack.c.l.b16 %v67
    %v113 = vunpack.c.l.b16 %v68
    %v114 = vunpack.c.l.b16 %v69
    %v115 = vunpack.c.l.b16 %v70
    %v116 = vunpack.c.l.b16 %v71
    %v117 = vunpack.c.l.b16 %v72
    %v118 = vunpack.c.l.b16 %v73
    %v119 = vunpack.c.l.b16 %v74
    %v120 = vunpack.c.l.b16 %v75
    %v121 = vunpack.c.l.b16 %v76
    %v122 = vunpack.c.l.b16 %v77
    %v123 = vunpack.c.l.b16 %v78
    %v124 = vunpack.c.l.b16 %v79
    %v125 = vunpack.c.l.b16 %v80
    %v126 = vpack.c.b16 %v111, %v110
    %v127 = vpack.c.b16 %v113, %v112
    %v128 = vpack.c.b16 %v115, %v114
    %v129 = vpack.c.b16 %v117, %v116
    %v130 = vpack.c.b16 %v119, %v118
    %v131 = vpack.c.b16 %v121, %v120
    %v132 = vpack.c.b16 %v123, %v122
    %v133 = vpack.c.b16 %v125, %v124
    %142 = vmatprep.subr.bf16.mxu0 0
    %143 = vmatpush1.bf16.msra.mxu0 %v133
    %144 = vmatprep.subr.bf16.mxu0 0
    %145 = vmatpush1.bf16.msra.mxu0 %v132
    %146 = vmatprep.subr.bf16.mxu0 0
    %147 = vmatpush1.bf16.msra.mxu0 %v131
    %148 = vmatprep.subr.bf16.mxu0 0
    %149 = vmatpush1.bf16.msra.mxu0 %v130
    %150 = vmatprep.subr.bf16.mxu0 0
    %151 = vmatpush1.bf16.msra.mxu0 %v129
    %152 = vmatprep.subr.bf16.mxu0 0
    %153 = vmatpush1.bf16.msra.mxu0 %v128
    %154 = vmatprep.subr.bf16.mxu0 0
    %155 = vmatpush1.bf16.msra.mxu0 %v127
    %156 = vmatprep.subr.bf16.mxu0 0
    %157 = vmatpush1.bf16.msra.mxu0 %v126
    %158 = vmatprep.subr.bf16.mxu0 0
    %159 = vmatpush2.bf16.msra.mxu0 0
    %160 = vmatprep.subr.bf16.mxu0 0
    %161 = vmatpush2.bf16.msra.mxu0 0
    %162 = vmatprep.subr.bf16.mxu0 0
    %163 = vmatpush2.bf16.msra.mxu0 0
    %164 = vmatprep.subr.bf16.mxu0 0
    %165 = vmatpush2.bf16.msra.mxu0 0
    %166 = vmatprep.subr.bf16.mxu0 0
    %167 = vmatpush2.bf16.msra.mxu0 0
    %168 = vmatprep.subr.bf16.mxu0 0
    %169 = vmatpush2.bf16.msra.mxu0 0
    %170 = vmatprep.subr.bf16.mxu0 0
    %171 = vmatpush2.bf16.msra.mxu0 0
    %172 = vmatprep.subr.bf16.mxu0 0
    %173 = vmatpush2.bf16.msra.mxu0 0
    %174 = vmatprep.mubr.bf16.mxu0 0
    %175 = vmatmul.mubr.bf16.gmra.mxu0 %v92
    %v176 = vpop.f32.mrf.mxu0
    %v177 = vadd.f32 %v86, %v176
    %v178 = vpop.f32.mrf.mxu0
    %v179 = vpop.f32.mrf.mxu0
    %v180 = vadd.f32 %v86, %v179
    %v181 = vpop.f32.mrf.mxu0
    %182 = vdwg.mxu0
    %v183 = vmax.f32 %v177, 0.0
    %v184 = vmax.f32 %v180, 0.0
    %v185 = vpack.c.bf16 %v184, %v183
    %v186 = vld [vmem:[#allocation7] sm:$0xf]
    %v187 = vld [vmem:[#allocation7 + $0x4] sm:$0xf]
    %v188 = vld [vmem:[#allocation7 + $0x8] sm:$0xf]
    %v189 = vld [vmem:[#allocation7 + $0xc] sm:$0xf]
    %v190 = vld [vmem:[#allocation7 + $0x10] sm:$0xf]
    %v191 = vld [vmem:[#allocation7 + $0x14] sm:$0xf]
    %v192 = vld [vmem:[#allocation7 + $0x18] sm:$0xf]
    %v193 = vld [vmem:[#allocation7 + $0x1c] sm:$0xf]
    %v194 = vld [vmem:[#allocation7 + $0x20] sm:$0xf]
    %v195 = vld [vmem:[#allocation7 + $0x24] sm:$0xf]
    %v196 = vld [vmem:[#allocation7 + $0x28] sm:$0xf]
    %v197 = vld [vmem:[#allocation7 + $0x2c] sm:$0xf]
    %v198 = vld [vmem:[#allocation7 + $0x30] sm:$0xf]
    %v199 = vld [vmem:[#allocation7 + $0x34] sm:$0xf]
    %v200 = vld [vmem:[#allocation7 + $0x38] sm:$0xf]
    %v201 = vld [vmem:[#allocation7 + $0x3c] sm:$0xf]
    %v202 = vld [vmem:[%s4] sm:$0x1]
    %v204 = vlaneseq
    %v205 = vshrl.u32 %v204, 7
    %v206 = vsub.s32 0, %v205
    %v207 = vrot.slane %v202, %v206
    %v225 = vunpack.c.l.b16 %v186
    %v226 = vunpack.c.l.b16 %v187
    %v227 = vunpack.c.l.b16 %v188
    %v228 = vunpack.c.l.b16 %v189
    %v229 = vunpack.c.l.b16 %v190
    %v230 = vunpack.c.l.b16 %v191
    %v231 = vunpack.c.l.b16 %v192
    %v232 = vunpack.c.l.b16 %v193
    %v233 = vunpack.c.l.b16 %v194
    %v234 = vunpack.c.l.b16 %v195
    %v235 = vunpack.c.l.b16 %v196
    %v236 = vunpack.c.l.b16 %v197
    %v237 = vunpack.c.l.b16 %v198
    %v238 = vunpack.c.l.b16 %v199
    %v239 = vunpack.c.l.b16 %v200
    %v240 = vunpack.c.l.b16 %v201
    %v241 = vpack.c.b16 %v226, %v225
    %v242 = vpack.c.b16 %v228, %v227
    %v243 = vpack.c.b16 %v230, %v229
    %v244 = vpack.c.b16 %v232, %v231
    %v245 = vpack.c.b16 %v234, %v233
    %v246 = vpack.c.b16 %v236, %v235
    %v247 = vpack.c.b16 %v238, %v237
    %v248 = vpack.c.b16 %v240, %v239
    %257 = vmatprep.subr.bf16.mxu0 0
    %258 = vmatpush1.bf16.msra.mxu0 %v248
    %259 = vmatprep.subr.bf16.mxu0 0
    %260 = vmatpush1.bf16.msra.mxu0 %v247
    %261 = vmatprep.subr.bf16.mxu0 0
    %262 = vmatpush1.bf16.msra.mxu0 %v246
    %263 = vmatprep.subr.bf16.mxu0 0
    %264 = vmatpush1.bf16.msra.mxu0 %v245
    %265 = vmatprep.subr.bf16.mxu0 0
    %266 = vmatpush1.bf16.msra.mxu0 %v244
    %267 = vmatprep.subr.bf16.mxu0 0
    %268 = vmatpush1.bf16.msra.mxu0 %v243
    %269 = vmatprep.subr.bf16.mxu0 0
    %270 = vmatpush1.bf16.msra.mxu0 %v242
    %271 = vmatprep.subr.bf16.mxu0 0
    %272 = vmatpush1.bf16.msra.mxu0 %v241
    %273 = vmatprep.subr.bf16.mxu0 0
    %274 = vmatpush2.bf16.msra.mxu0 0
    %275 = vmatprep.subr.bf16.mxu0 0
    %276 = vmatpush2.bf16.msra.mxu0 0
    %277 = vmatprep.subr.bf16.mxu0 0
    %278 = vmatpush2.bf16.msra.mxu0 0
    %279 = vmatprep.subr.bf16.mxu0 0
    %280 = vmatpush2.bf16.msra.mxu0 0
    %281 = vmatprep.subr.bf16.mxu0 0
    %282 = vmatpush2.bf16.msra.mxu0 0
    %283 = vmatprep.subr.bf16.mxu0 0
    %284 = vmatpush2.bf16.msra.mxu0 0
    %285 = vmatprep.subr.bf16.mxu0 0
    %286 = vmatpush2.bf16.msra.mxu0 0
    %287 = vmatprep.subr.bf16.mxu0 0
    %288 = vmatpush2.bf16.msra.mxu0 0
    %289 = vmatprep.mubr.bf16.mxu0 0
    %290 = vmatmul.mubr.bf16.gmra.mxu0 %v185
    %v291 = vpop.f32.mrf.mxu0
    %v292 = vadd.f32 %v207, %v291
    %v293 = vpop.f32.mrf.mxu0
    %v294 = vpop.f32.mrf.mxu0
    %v295 = vadd.f32 %v207, %v294
    %v296 = vpop.f32.mrf.mxu0
    %297 = vdwg.mxu0
    %v298 = vmax.f32 %v292, 0.0
    %v299 = vmax.f32 %v295, 0.0
    %300 = vst [vmem:[#allocation8] sm:$0xff] %v298
    %301 = vst [vmem:[#allocation8 + $0x8] sm:$0xff] %v299
    // Predicated region
    $region34: #{tpu_custom_call.1} parent=1 // pred_check
      _
    $region35: #{tpu_custom_call.1} parent=1 // pred_check_branch
      %303 = sbr.rel (0) target = $region37
    $region36: #{tpu_custom_call.1} parent=1 // pred_region
      %s305 = ssub.s32 256, 256
      %306 = vsyncadd [#allocation4], %s305
      %s307 = sshll.u32 [#allocation8], 4
      %s308 = int_to_ptr.vmem [resolvable:$true] %s307
      %313 = dma.vmem_to_hbm [thread:$0]  %s308, 256, %s5, [#allocation4], 128, 128, 8
    $region37: #{tpu_custom_call.1} parent=1 // pred_fallthru
      _
    // Predicated region
    $region38: #{tpu_custom_call.1} parent=1 // pred_check
      _
    $region39: #{tpu_custom_call.1} parent=1 // pred_check_branch
      %315 = sbr.rel (0) target = $region41
    $region40: #{tpu_custom_call.1} parent=1 // pred_region
      %316 = dma.done [#allocation4], 256
    $region41: #{tpu_custom_call.1} parent=1 // pred_fallthru
      _
    %317 = vsyncpa [#allocation3], 1
    %318 = vsyncpa [#allocation6], 1
    %319 = vsyncpa [#allocation4], 1

</llo_original>
